<compile_context>
chip_gen: v7x
topology: tpu7x:2x2x1
jax: 0.10.0
libtpu: 0.0.40
codegen_flags: <defaults>
</compile_context>

<pallas_src>
import jax
import jax.numpy as jnp
from jax.experimental import pallas as pl
from jax.experimental.pallas import tpu as pltpu

IN_FEATURES = 784
IN_PAD = 896          # 7 * 128 -> lane-aligned K for the first matmul
HIDDEN = 128
OUT_FEATURES = 10
OUT_PAD = 128         # lane-dense output tile (no masked vst)
MAX_TILE_B = 1024     # ~85% of HBM roofline; well under VMEM caps


def _round_up(n, m):
    return (n + m - 1) // m * m


def mlp_kernel(x_ref, w1_ref, b1_ref, w2_ref, b2_ref, o_ref, xpad_ref):
    # x:    (tile_b, 784) f32      w1: (896, 128) bf16   b1: (1, 128) f32
    # w2:   (128, 128)   bf16      b2: (1, 128)  f32     o:  (tile_b, 128) bf16
    # xpad: (tile_b, 896) bf16 VMEM scratch (cast + zero-padded K).
    xpad_ref[:, :IN_FEATURES] = x_ref[...].astype(jnp.bfloat16)
    xpad_ref[:, IN_FEATURES:] = jnp.zeros(
        (xpad_ref.shape[0], IN_PAD - IN_FEATURES), jnp.bfloat16)

    h = jnp.dot(xpad_ref[...], w1_ref[...], preferred_element_type=jnp.float32)
    h = jnp.maximum(h + b1_ref[...], 0.0)                      # bias + relu, f32
    y = jnp.dot(h.astype(jnp.bfloat16), w2_ref[...],
                preferred_element_type=jnp.float32)
    o_ref[...] = (y + b2_ref[...]).astype(o_ref.dtype)          # bf16 writeback


def mlp_forward(x_nchw, w1, b1, w2, b2):
    """x_nchw: (B,1,28,28) f32.  w1: (896,128) bf16, b1: (1,128) f32,
    w2: (128,128) bf16, b2: (1,128) f32.  Returns (B, 10) f32 logits."""
    B = x_nchw.shape[0]
    x2d = x_nchw.reshape(B, -1)                                  # view, no copy
    assert x2d.shape[1] == IN_FEATURES, f"expected 784 features, got {x2d.shape[1]}"

    # Balanced batch tiling: >=2 grid steps when batch allows (v7x megacore +
    # DMA/compute overlap), padding bounded to <1 row group instead of a tile.
    num_steps = max(1, -(-B // MAX_TILE_B))
    if num_steps < 2 and B >= 16:
        num_steps = 2
    tile_b = _round_up(-(-B // num_steps), 8)
    b_pad = tile_b * num_steps

    if b_pad != B:
        x2d = jnp.pad(x2d, ((0, b_pad - B), (0, 0)))             # batch rows only

    flops = 2 * b_pad * (IN_PAD * HIDDEN + HIDDEN * OUT_PAD)
    bytes_accessed = (b_pad * IN_FEATURES * 4           # x (f32)
                      + IN_PAD * HIDDEN * 2              # w1 (bf16)
                      + HIDDEN * OUT_PAD * 2             # w2 (bf16)
                      + (HIDDEN + OUT_PAD) * 4           # biases (f32)
                      + b_pad * OUT_PAD * 2)             # out (bf16)

    out = pl.pallas_call(
        mlp_kernel,
        out_shape=jax.ShapeDtypeStruct((b_pad, OUT_PAD), jnp.bfloat16),
        grid=(num_steps,),
        in_specs=[
            # x tiles walk the batch grid; full-extent 784 last dim (legal:
            # equals the array dim), double-buffered by Pallas.
            pl.BlockSpec((tile_b, IN_FEATURES), lambda i: (i, 0)),
            # Weights/biases: constant index_map -> fetched once, resident.
            pl.BlockSpec((IN_PAD, HIDDEN), lambda i: (0, 0)),
            pl.BlockSpec((1, HIDDEN), lambda i: (0, 0)),
            pl.BlockSpec((HIDDEN, OUT_PAD), lambda i: (0, 0)),
            pl.BlockSpec((1, OUT_PAD), lambda i: (0, 0)),
        ],
        out_specs=pl.BlockSpec((tile_b, OUT_PAD), lambda i: (i, 0)),
        scratch_shapes=[pltpu.VMEM((tile_b, IN_PAD), jnp.bfloat16)],
        compiler_params=pltpu.CompilerParams(
            # Batch axis is independent -> megacore sharding on v7x.
            dimension_semantics=("parallel",),
        ),
        cost_estimate=pl.CostEstimate(
            flops=flops, transcendentals=0, bytes_accessed=bytes_accessed),
    )(x2d, w1, b1, w2, b2)

    # Consumers that can work on the padded (b_pad, 128) bf16 logits directly
    # (argmax/softmax over the first 10 columns) should skip this slice.
    return out[:B, :OUT_FEATURES].astype(jnp.float32)


def init_params(key):
    # Deterministic init mimicking nn.Linear's U(-1/sqrt(fan_in), 1/sqrt(fan_in)).
    k1, k2, k3, k4 = jax.random.split(key, 4)
    lim1 = 1.0 / jnp.sqrt(784.0)
    lim2 = 1.0 / jnp.sqrt(128.0)
    w1 = jax.random.uniform(k1, (IN_FEATURES, HIDDEN), jnp.float32, -lim1, lim1)
    b1 = jax.random.uniform(k2, (1, HIDDEN), jnp.float32, -lim1, lim1)
    w2 = jax.random.uniform(k3, (HIDDEN, OUT_FEATURES), jnp.float32, -lim2, lim2)
    b2 = jax.random.uniform(k4, (1, OUT_FEATURES), jnp.float32, -lim2, lim2)

    # Kernel storage layout (one-time cost): bf16 weights, zero-padded K / out.
    w1_p = jnp.pad(w1, ((0, IN_PAD - IN_FEATURES), (0, 0))).astype(jnp.bfloat16)
    w2_p = jnp.pad(w2, ((0, 0), (0, OUT_PAD - OUT_FEATURES))).astype(jnp.bfloat16)
    b2_p = jnp.pad(b2, ((0, 0), (0, OUT_PAD - OUT_FEATURES)))
    return (w1_p, b1, w2_p, b2_p), (w1, b1, w2, b2)


if __name__ == "__main__":
    key = jax.random.PRNGKey(0)
    kx, kp = jax.random.split(key)

    # Small MNIST-like NCHW input (784 = 1*28*28).
    x = jax.random.normal(kx, (4, 1, 28, 28), dtype=jnp.float32)
    (w1p, b1p, w2p, b2p), (w1, b1, w2, b2) = init_params(kp)

    y = mlp_forward(x, w1p, b1p, w2p, b2p)
    jax.block_until_ready(y)

    # Pure-JAX reference matching the kernel's numerics (bf16 MXU inputs,
    # f32 accumulation, bf16 logits writeback).
    x2d = x.reshape(x.shape[0], -1).astype(jnp.bfloat16).astype(jnp.float32)
    w1r = w1.astype(jnp.bfloat16).astype(jnp.float32)
    w2r = w2.astype(jnp.bfloat16).astype(jnp.float32)
    h = jnp.maximum(x2d @ w1r + b1, 0.0)
    ref = h.astype(jnp.bfloat16).astype(jnp.float32) @ w2r + b2
    ref = ref.astype(jnp.bfloat16).astype(jnp.float32)

    assert y.shape == (4, 10), y.shape
    err = float(jnp.max(jnp.abs(y - ref)))
    assert jnp.allclose(y, ref, atol=1e-2, rtol=1e-2), err

    print("KERNEL_OK")
</pallas_src>

<mosaic_0001>
module attributes {stable_mosaic.version = 11 : i64} {
  func.func @mlp_kernel(%arg0: i32, %arg1: memref<8x784xf32, #tpu.memory_space<vmem>>, %arg2: memref<896x128xbf16, #tpu.memory_space<vmem>>, %arg3: memref<1x128xf32, #tpu.memory_space<vmem>>, %arg4: memref<128x128xbf16, #tpu.memory_space<vmem>>, %arg5: memref<1x128xf32, #tpu.memory_space<vmem>>, %arg6: memref<8x128xbf16, #tpu.memory_space<vmem>>, %arg7: memref<8x896xbf16, #tpu.memory_space<vmem>>) attributes {dimension_semantics = [#tpu.dimension_semantics<parallel>], iteration_bounds = array<i64: 1>, scalar_prefetch = 0 : i64, scratch_operands = 1 : i64, tpu.core_type = #tpu.core_type<tc>, window_params = [{transform_indices = @transform_0, window_bounds = array<i64: 8, 784>}, {pipeline_mode = #tpu.pipeline_mode<synchronous>, transform_indices = @transform_1, window_bounds = array<i64: 896, 128>}, {pipeline_mode = #tpu.pipeline_mode<synchronous>, transform_indices = @transform_2, window_bounds = array<i64: 1, 128>}, {pipeline_mode = #tpu.pipeline_mode<synchronous>, transform_indices = @transform_3, window_bounds = array<i64: 128, 128>}, {pipeline_mode = #tpu.pipeline_mode<synchronous>, transform_indices = @transform_4, window_bounds = array<i64: 1, 128>}, {transform_indices = @transform_5, window_bounds = array<i64: 8, 128>}]} {
    %c0 = arith.constant 0 : index
    %c0_0 = arith.constant 0 : index
    %0 = vector.load %arg1[%c0, %c0_0] : memref<8x784xf32, #tpu.memory_space<vmem>>, vector<8x784xf32>
    %1 = arith.truncf %0 : vector<8x784xf32> to vector<8x784xbf16>
    %c0_1 = arith.constant 0 : index
    %c0_2 = arith.constant 0 : index
    %2 = vector.load %arg7[%c0_1, %c0_2] : memref<8x896xbf16, #tpu.memory_space<vmem>>, vector<8x784xbf16>
    tpu.vector_store %arg7[%c0_1, %c0_2], %1 {strides = array<i32>} : memref<8x896xbf16, #tpu.memory_space<vmem>>, vector<8x784xbf16>,
    %cst = arith.constant 0.000000e+00 : bf16
    %3 = vector.broadcast %cst : bf16 to vector<8x112xbf16>
    %c0_3 = arith.constant 0 : index
    %c784 = arith.constant 784 : index
    %4 = vector.load %arg7[%c0_3, %c784] : memref<8x896xbf16, #tpu.memory_space<vmem>>, vector<8x112xbf16>
    tpu.vector_store %arg7[%c0_3, %c784], %3 {strides = array<i32>} : memref<8x896xbf16, #tpu.memory_space<vmem>>, vector<8x112xbf16>,
    %c0_4 = arith.constant 0 : index
    %c0_5 = arith.constant 0 : index
    %5 = vector.load %arg7[%c0_4, %c0_5] : memref<8x896xbf16, #tpu.memory_space<vmem>>, vector<8x896xbf16>
    %c0_6 = arith.constant 0 : index
    %c0_7 = arith.constant 0 : index
    %6 = vector.load %arg2[%c0_6, %c0_7] : memref<896x128xbf16, #tpu.memory_space<vmem>>, vector<896x128xbf16>
    %cst_8 = arith.constant dense<0.000000e+00> : vector<8x128xf32>
    %7 = tpu.matmul %5, %6, %cst_8 {dimension_numbers = #tpu.dot_dimension_numbers<[1], [0], [0], [1], [0, 0, 1, 1], [], []>} : vector<8x896xbf16>, vector<896x128xbf16>, vector<8x128xf32> -> vector<8x128xf32>
    %c0_9 = arith.constant 0 : index
    %c0_10 = arith.constant 0 : index
    %8 = vector.load %arg3[%c0_9, %c0_10] : memref<1x128xf32, #tpu.memory_space<vmem>>, vector<1x128xf32>
    %9 = vector.broadcast %8 : vector<1x128xf32> to vector<8x128xf32>
    %10 = arith.addf %7, %9 : vector<8x128xf32>
    %cst_11 = arith.constant 0.000000e+00 : f32
    %11 = vector.broadcast %cst_11 : f32 to vector<8x128xf32>
    %12 = arith.maximumf %10, %11 : vector<8x128xf32>
    %13 = arith.truncf %12 : vector<8x128xf32> to vector<8x128xbf16>
    %c0_12 = arith.constant 0 : index
    %c0_13 = arith.constant 0 : index
    %14 = vector.load %arg4[%c0_12, %c0_13] : memref<128x128xbf16, #tpu.memory_space<vmem>>, vector<128x128xbf16>
    %cst_14 = arith.constant dense<0.000000e+00> : vector<8x128xf32>
    %15 = tpu.matmul %13, %14, %cst_14 {dimension_numbers = #tpu.dot_dimension_numbers<[1], [0], [0], [1], [0, 0, 1, 1], [], []>} : vector<8x128xbf16>, vector<128x128xbf16>, vector<8x128xf32> -> vector<8x128xf32>
    %c0_15 = arith.constant 0 : index
    %c0_16 = arith.constant 0 : index
    %16 = vector.load %arg5[%c0_15, %c0_16] : memref<1x128xf32, #tpu.memory_space<vmem>>, vector<1x128xf32>
    %17 = vector.broadcast %16 : vector<1x128xf32> to vector<8x128xf32>
    %18 = arith.addf %15, %17 : vector<8x128xf32>
    %19 = arith.truncf %18 : vector<8x128xf32> to vector<8x128xbf16>
    %c0_17 = arith.constant 0 : index
    %c0_18 = arith.constant 0 : index
    %20 = vector.load %arg6[%c0_17, %c0_18] : memref<8x128xbf16, #tpu.memory_space<vmem>>, vector<8x128xbf16>
    tpu.vector_store %arg6[%c0_17, %c0_18], %19 {strides = array<i32>} : memref<8x128xbf16, #tpu.memory_space<vmem>>, vector<8x128xbf16>,
    return
  }
  func.func @transform_0(%arg0: i32) -> (i32, i32) {
    %c0_i32 = arith.constant 0 : i32
    %c0_i32_0 = arith.constant 0 : i32
    return %arg0, %c0_i32 : i32, i32
  }
  func.func @transform_1(%arg0: i32) -> (i32, i32) {
    %c0_i32 = arith.constant 0 : i32
    %c0_i32_0 = arith.constant 0 : i32
    %c0_i32_1 = arith.constant 0 : i32
    return %c0_i32, %c0_i32_0 : i32, i32
  }
  func.func @transform_2(%arg0: i32) -> (i32, i32) {
    %c0_i32 = arith.constant 0 : i32
    %c0_i32_0 = arith.constant 0 : i32
    %c0_i32_1 = arith.constant 0 : i32
    return %c0_i32, %c0_i32_0 : i32, i32
  }
  func.func @transform_3(%arg0: i32) -> (i32, i32) {
    %c0_i32 = arith.constant 0 : i32
    %c0_i32_0 = arith.constant 0 : i32
    %c0_i32_1 = arith.constant 0 : i32
    return %c0_i32, %c0_i32_0 : i32, i32
  }
  func.func @transform_4(%arg0: i32) -> (i32, i32) {
    %c0_i32 = arith.constant 0 : i32
    %c0_i32_0 = arith.constant 0 : i32
    %c0_i32_1 = arith.constant 0 : i32
    return %c0_i32, %c0_i32_0 : i32, i32
  }
  func.func @transform_5(%arg0: i32) -> (i32, i32) {
    %c0_i32 = arith.constant 0 : i32
    %c0_i32_0 = arith.constant 0 : i32
    return %arg0, %c0_i32 : i32, i32
  }
}

</mosaic_0001>

<llo_original>
// kernel: tpu_custom_call.1
$region0: #{tpu_custom_call.1}
  #allocation0 [shape = 'u32[]', space=smem, size = 0x4, offset = 0x4, fixed_abs, tag = 'smem constant byte address 0x4 - core index']
  #allocation1 [shape = 'u32[144,128]{1,0:T(1,128)}', space=vmem, size = 0x12000, scoped, tag = 'internal scratch']
  #allocation2 [shape = 'bf16[8,896]{1,0:T(8,128)(2,1)}', space=vmem, size = 0x3800, scoped, tag = 'scratch operand']
  %s0 = inlined_call_operand.hbm [shape: f32[8,784], index: 0, kind: input, shape index: {}]
  %s1 = inlined_call_operand.hbm [shape: bf16[896,128], index: 1, kind: input, shape index: {}]
  %s2 = inlined_call_operand.vmem [shape: f32[1,128], index: 2, kind: input, shape index: {}]
  %s3 = inlined_call_operand.hbm [shape: bf16[128,128], index: 3, kind: input, shape index: {}]
  %s4 = inlined_call_operand.vmem [shape: f32[1,128], index: 4, kind: input, shape index: {}]
  %s5 = inlined_call_operand.hbm [shape: bf16[8,128], index: 5, kind: output, shape index: {}]
  %s6 = sld [smem:[#allocation0]]
  $region42: #{tpu_custom_call.1} parent=0
    _
  %s8 = ssub.s32 1, %s6
  %s9 = scalar_select 0, %s8, %s6
  $region1: #{tpu_custom_call.1} parent=0
    #allocation3 [shape = 'u8[28672]{0}', space=vmem, size = 0x7000, scoped, tag = 'input window, operand 0, single buffered']
    #allocation4 [shape = 's32[1]{0}', space=sflag, size = 0x4, scoped, tag = 'scoped memory for tpu_custom_call.1']
    #allocation5 [shape = 's32[1]{0}', space=sflag, size = 0x4, scoped, tag = 'scoped memory for tpu_custom_call.1']
    #allocation6 [shape = 'u8[229376]{0}', space=vmem, size = 0x38000, scoped, tag = 'input window, operand 1, single buffered']
    #allocation7 [shape = 's32[1]{0}', space=sflag, size = 0x4, scoped, tag = 'scoped memory for tpu_custom_call.1']
    #allocation8 [shape = 'u8[32768]{0}', space=vmem, size = 0x8000, scoped, tag = 'input window, operand 3, single buffered']
    #allocation9 [shape = 'u8[2048]{0}', space=vmem, size = 0x800, scoped, tag = 'output window, operand 0, single buffered']
    %10 = vsyncpa [#allocation4], 0
    %11 = vsyncpa [#allocation7], 0
    %12 = vsyncpa [#allocation5], 0
    // Predicated region
    $region2: #{tpu_custom_call.1} parent=1 // pred_check
      _
    $region3: #{tpu_custom_call.1} parent=1 // pred_check_branch
      %14 = sbr.rel (0) target = $region5
    $region4: #{tpu_custom_call.1} parent=1 // pred_region
      %s16 = ssub.s32 896, 896
      %17 = vsyncadd [#allocation4], %s16
      %s19 = sshll.u32 [#allocation3], 4
      %s20 = int_to_ptr.vmem [resolvable:$true] %s19
      %22 = dma.hbm_to_vmem [thread:$0]  %s0, 896, %s20, [#allocation4]
    $region5: #{tpu_custom_call.1} parent=1 // pred_fallthru
      _
    // Predicated region
    $region6: #{tpu_custom_call.1} parent=1 // pred_check
      _
    $region7: #{tpu_custom_call.1} parent=1 // pred_check_branch
      %24 = sbr.rel (0) target = $region9
    $region8: #{tpu_custom_call.1} parent=1 // pred_region
      %s26 = ssub.s32 7168, 7168
      %27 = vsyncadd [#allocation7], %s26
      %s28 = sshll.u32 [#allocation6], 4
      %s29 = int_to_ptr.vmem [resolvable:$true] %s28
      %34 = dma.hbm_to_vmem [thread:$0]  %s1, 7168, %s29, [#allocation7], 64, 64, 4
    $region9: #{tpu_custom_call.1} parent=1 // pred_fallthru
      _
    // Predicated region
    $region10: #{tpu_custom_call.1} parent=1 // pred_check
      _
    $region11: #{tpu_custom_call.1} parent=1 // pred_check_branch
      %36 = sbr.rel (0) target = $region13
    $region12: #{tpu_custom_call.1} parent=1 // pred_region
      _
    $region13: #{tpu_custom_call.1} parent=1 // pred_fallthru
      _
    // Predicated region
    $region14: #{tpu_custom_call.1} parent=1 // pred_check
      _
    $region15: #{tpu_custom_call.1} parent=1 // pred_check_branch
      %38 = sbr.rel (0) target = $region17
    $region16: #{tpu_custom_call.1} parent=1 // pred_region
      %s40 = ssub.s32 1024, 1024
      %41 = vsyncadd [#allocation7], %s40
      %s42 = sshll.u32 [#allocation8], 4
      %s43 = int_to_ptr.vmem [resolvable:$true] %s42
      %48 = dma.hbm_to_vmem [thread:$0]  %s3, 1024, %s43, [#allocation7], 64, 64, 4
    $region17: #{tpu_custom_call.1} parent=1 // pred_fallthru
      _
    // Predicated region
    $region18: #{tpu_custom_call.1} parent=1 // pred_check
      _
    $region19: #{tpu_custom_call.1} parent=1 // pred_check_branch
      %50 = sbr.rel (0) target = $region21
    $region20: #{tpu_custom_call.1} parent=1 // pred_region
      _
    $region21: #{tpu_custom_call.1} parent=1 // pred_fallthru
      _
    // Predicated region
    $region22: #{tpu_custom_call.1} parent=1 // pred_check
      _
    $region23: #{tpu_custom_call.1} parent=1 // pred_check_branch
      %52 = sbr.rel (0) target = $region25
    $region24: #{tpu_custom_call.1} parent=1 // pred_region
      %53 = dma.done [#allocation4], 896
    $region25: #{tpu_custom_call.1} parent=1 // pred_fallthru
      _
    // Predicated region
    $region26: #{tpu_custom_call.1} parent=1 // pred_check
      _
    $region27: #{tpu_custom_call.1} parent=1 // pred_check_branch
      %55 = sbr.rel (0) target = $region29
    $region28: #{tpu_custom_call.1} parent=1 // pred_region
      %56 = dma.done [#allocation7], 7168
    $region29: #{tpu_custom_call.1} parent=1 // pred_fallthru
      _
    // Predicated region
    $region30: #{tpu_custom_call.1} parent=1 // pred_check
      _
    $region31: #{tpu_custom_call.1} parent=1 // pred_check_branch
      %58 = sbr.rel (0) target = $region33
    $region32: #{tpu_custom_call.1} parent=1 // pred_region
      %59 = dma.done [#allocation7], 1024
    $region33: #{tpu_custom_call.1} parent=1 // pred_fallthru
      _
    %v61 = vld [vmem:[#allocation3] sm:$0xff]
    %v62 = vld [vmem:[#allocation3 + $0x8] sm:$0xff]
    %v63 = vld [vmem:[#allocation3 + $0x10] sm:$0xff]
    %v64 = vld [vmem:[#allocation3 + $0x18] sm:$0xff]
    %v65 = vld [vmem:[#allocation3 + $0x20] sm:$0xff]
    %v66 = vld [vmem:[#allocation3 + $0x28] sm:$0xff]
    %v67 = vld [vmem:[#allocation3 + $0x30] sm:$0xff]
    %v68 = vpack.c.bf16 %v61, %v61
    %v69 = vpack.c.bf16 %v62, %v62
    %v70 = vpack.c.bf16 %v63, %v63
    %v71 = vpack.c.bf16 %v64, %v64
    %v72 = vpack.c.bf16 %v65, %v65
    %v73 = vpack.c.bf16 %v66, %v66
    %v74 = vpack.c.bf16 %v67, %v67
    %v82 = vunpack.c.l.b16 %v68
    %v83 = vunpack.c.l.b16 %v69
    %v84 = vunpack.c.l.b16 %v70
    %v85 = vunpack.c.l.b16 %v71
    %v86 = vunpack.c.l.b16 %v72
    %v87 = vunpack.c.l.b16 %v73
    %v88 = vunpack.c.l.b16 %v74
    %v89 = vpack.c.b16 %v83, %v82
    %v90 = vpack.c.b16 %v85, %v84
    %v91 = vpack.c.b16 %v87, %v86
    %v92 = vpack.c.b16 %v88, %v88
    %97 = vst [vmem:[#allocation2] sm:$0xff] %v89
    %98 = vst [vmem:[#allocation2 + $0x8] sm:$0xff] %v90
    %99 = vst [vmem:[#allocation2 + $0x10] sm:$0xff] %v91
    %vm100 = vcmask 125952
    %101 = vst.msk [vmem:[#allocation2 + $0x18] sm:$0xf] %vm100, %v92
    %vm102 = vcmask 1043584
    %103 = vst.msk [vmem:[#allocation2 + $0x18] sm:$0xf] %vm102, 0
    %v104 = vld [vmem:[#allocation2] sm:$0xff]
    %v105 = vld [vmem:[#allocation2 + $0x8] sm:$0xff]
    %v106 = vld [vmem:[#allocation2 + $0x10] sm:$0xff]
    %v107 = vld [vmem:[#allocation2 + $0x18] sm:$0xf]
    %v108 = vld [vmem:[#allocation6] sm:$0xf]
    %v109 = vld [vmem:[#allocation6 + $0x4] sm:$0xf]
    %v110 = vld [vmem:[#allocation6 + $0x8] sm:$0xf]
    %v111 = vld [vmem:[#allocation6 + $0xc] sm:$0xf]
    %v112 = vld [vmem:[#allocation6 + $0x10] sm:$0xf]
    %v113 = vld [vmem:[#allocation6 + $0x14] sm:$0xf]
    %v114 = vld [vmem:[#allocation6 + $0x18] sm:$0xf]
    %v115 = vld [vmem:[#allocation6 + $0x1c] sm:$0xf]
    %v116 = vld [vmem:[#allocation6 + $0x20] sm:$0xf]
    %v117 = vld [vmem:[#allocation6 + $0x24] sm:$0xf]
    %v118 = vld [vmem:[#allocation6 + $0x28] sm:$0xf]
    %v119 = vld [vmem:[#allocation6 + $0x2c] sm:$0xf]
    %v120 = vld [vmem:[#allocation6 + $0x30] sm:$0xf]
    %v121 = vld [vmem:[#allocation6 + $0x34] sm:$0xf]
    %v122 = vld [vmem:[#allocation6 + $0x38] sm:$0xf]
    %v123 = vld [vmem:[#allocation6 + $0x3c] sm:$0xf]
    %v124 = vld [vmem:[#allocation6 + $0x40] sm:$0xf]
    %v125 = vld [vmem:[#allocation6 + $0x44] sm:$0xf]
    %v126 = vld [vmem:[#allocation6 + $0x48] sm:$0xf]
    %v127 = vld [vmem:[#allocation6 + $0x4c] sm:$0xf]
    %v128 = vld [vmem:[#allocation6 + $0x50] sm:$0xf]
    %v129 = vld [vmem:[#allocation6 + $0x54] sm:$0xf]
    %v130 = vld [vmem:[#allocation6 + $0x58] sm:$0xf]
    %v131 = vld [vmem:[#allocation6 + $0x5c] sm:$0xf]
    %v132 = vld [vmem:[#allocation6 + $0x60] sm:$0xf]
    %v133 = vld [vmem:[#allocation6 + $0x64] sm:$0xf]
    %v134 = vld [vmem:[#allocation6 + $0x68] sm:$0xf]
    %v135 = vld [vmem:[#allocation6 + $0x6c] sm:$0xf]
    %v136 = vld [vmem:[#allocation6 + $0x70] sm:$0xf]
    %v137 = vld [vmem:[#allocation6 + $0x74] sm:$0xf]
    %v138 = vld [vmem:[#allocation6 + $0x78] sm:$0xf]
    %v139 = vld [vmem:[#allocation6 + $0x7c] sm:$0xf]
    %v140 = vld [vmem:[#allocation6 + $0x80] sm:$0xf]
    %v141 = vld [vmem:[#allocation6 + $0x84] sm:$0xf]
    %v142 = vld [vmem:[#allocation6 + $0x88] sm:$0xf]
    %v143 = vld [vmem:[#allocation6 + $0x8c] sm:$0xf]
    %v144 = vld [vmem:[#allocation6 + $0x90] sm:$0xf]
    %v145 = vld [vmem:[#allocation6 + $0x94] sm:$0xf]
    %v146 = vld [vmem:[#allocation6 + $0x98] sm:$0xf]
    %v147 = vld [vmem:[#allocation6 + $0x9c] sm:$0xf]
    %v148 = vld [vmem:[#allocation6 + $0xa0] sm:$0xf]
    %v149 = vld [vmem:[#allocation6 + $0xa4] sm:$0xf]
    %v150 = vld [vmem:[#allocation6 + $0xa8] sm:$0xf]
    %v151 = vld [vmem:[#allocation6 + $0xac] sm:$0xf]
    %v152 = vld [vmem:[#allocation6 + $0xb0] sm:$0xf]
    %v153 = vld [vmem:[#allocation6 + $0xb4] sm:$0xf]
    %v154 = vld [vmem:[#allocation6 + $0xb8] sm:$0xf]
    %v155 = vld [vmem:[#allocation6 + $0xbc] sm:$0xf]
    %v156 = vld [vmem:[#allocation6 + $0xc0] sm:$0xf]
    %v157 = vld [vmem:[#allocation6 + $0xc4] sm:$0xf]
    %v158 = vld [vmem:[#allocation6 + $0xc8] sm:$0xf]
    %v159 = vld [vmem:[#allocation6 + $0xcc] sm:$0xf]
    %v160 = vld [vmem:[#allocation6 + $0xd0] sm:$0xf]
    %v161 = vld [vmem:[#allocation6 + $0xd4] sm:$0xf]
    %v162 = vld [vmem:[#allocation6 + $0xd8] sm:$0xf]
    %v163 = vld [vmem:[#allocation6 + $0xdc] sm:$0xf]
    %v164 = vld [vmem:[#allocation6 + $0xe0] sm:$0xf]
    %v165 = vld [vmem:[#allocation6 + $0xe4] sm:$0xf]
    %v166 = vld [vmem:[#allocation6 + $0xe8] sm:$0xf]
    %v167 = vld [vmem:[#allocation6 + $0xec] sm:$0xf]
    %v168 = vld [vmem:[#allocation6 + $0xf0] sm:$0xf]
    %v169 = vld [vmem:[#allocation6 + $0xf4] sm:$0xf]
    %v170 = vld [vmem:[#allocation6 + $0xf8] sm:$0xf]
    %v171 = vld [vmem:[#allocation6 + $0xfc] sm:$0xf]
    %v172 = vld [vmem:[#allocation6 + $0x100] sm:$0xf]
    %v173 = vld [vmem:[#allocation6 + $0x104] sm:$0xf]
    %v174 = vld [vmem:[#allocation6 + $0x108] sm:$0xf]
    %v175 = vld [vmem:[#allocation6 + $0x10c] sm:$0xf]
    %v176 = vld [vmem:[#allocation6 + $0x110] sm:$0xf]
    %v177 = vld [vmem:[#allocation6 + $0x114] sm:$0xf]
    %v178 = vld [vmem:[#allocation6 + $0x118] sm:$0xf]
    %v179 = vld [vmem:[#allocation6 + $0x11c] sm:$0xf]
    %v180 = vld [vmem:[#allocation6 + $0x120] sm:$0xf]
    %v181 = vld [vmem:[#allocation6 + $0x124] sm:$0xf]
    %v182 = vld [vmem:[#allocation6 + $0x128] sm:$0xf]
    %v183 = vld [vmem:[#allocation6 + $0x12c] sm:$0xf]
    %v184 = vld [vmem:[#allocation6 + $0x130] sm:$0xf]
    %v185 = vld [vmem:[#allocation6 + $0x134] sm:$0xf]
    %v186 = vld [vmem:[#allocation6 + $0x138] sm:$0xf]
    %v187 = vld [vmem:[#allocation6 + $0x13c] sm:$0xf]
    %v188 = vld [vmem:[#allocation6 + $0x140] sm:$0xf]
    %v189 = vld [vmem:[#allocation6 + $0x144] sm:$0xf]
    %v190 = vld [vmem:[#allocation6 + $0x148] sm:$0xf]
    %v191 = vld [vmem:[#allocation6 + $0x14c] sm:$0xf]
    %v192 = vld [vmem:[#allocation6 + $0x150] sm:$0xf]
    %v193 = vld [vmem:[#allocation6 + $0x154] sm:$0xf]
    %v194 = vld [vmem:[#allocation6 + $0x158] sm:$0xf]
    %v195 = vld [vmem:[#allocation6 + $0x15c] sm:$0xf]
    %v196 = vld [vmem:[#allocation6 + $0x160] sm:$0xf]
    %v197 = vld [vmem:[#allocation6 + $0x164] sm:$0xf]
    %v198 = vld [vmem:[#allocation6 + $0x168] sm:$0xf]
    %v199 = vld [vmem:[#allocation6 + $0x16c] sm:$0xf]
    %v200 = vld [vmem:[#allocation6 + $0x170] sm:$0xf]
    %v201 = vld [vmem:[#allocation6 + $0x174] sm:$0xf]
    %v202 = vld [vmem:[#allocation6 + $0x178] sm:$0xf]
    %v203 = vld [vmem:[#allocation6 + $0x17c] sm:$0xf]
    %v204 = vld [vmem:[#allocation6 + $0x180] sm:$0xf]
    %v205 = vld [vmem:[#allocation6 + $0x184] sm:$0xf]
    %v206 = vld [vmem:[#allocation6 + $0x188] sm:$0xf]
    %v207 = vld [vmem:[#allocation6 + $0x18c] sm:$0xf]
    %v208 = vld [vmem:[#allocation6 + $0x190] sm:$0xf]
    %v209 = vld [vmem:[#allocation6 + $0x194] sm:$0xf]
    %v210 = vld [vmem:[#allocation6 + $0x198] sm:$0xf]
    %v211 = vld [vmem:[#allocation6 + $0x19c] sm:$0xf]
    %v212 = vld [vmem:[#allocation6 + $0x1a0] sm:$0xf]
    %v213 = vld [vmem:[#allocation6 + $0x1a4] sm:$0xf]
    %v214 = vld [vmem:[#allocation6 + $0x1a8] sm:$0xf]
    %v215 = vld [vmem:[#allocation6 + $0x1ac] sm:$0xf]
    %v216 = vld [vmem:[#allocation6 + $0x1b0] sm:$0xf]
    %v217 = vld [vmem:[#allocation6 + $0x1b4] sm:$0xf]
    %v218 = vld [vmem:[#allocation6 + $0x1b8] sm:$0xf]
    %v219 = vld [vmem:[#allocation6 + $0x1bc] sm:$0xf]
    %v220 = vld [vmem:[%s2] sm:$0x1]
    %v222 = vlaneseq
    %v223 = vshrl.u32 %v222, 7
    %v224 = vsub.s32 0, %v223
    %v225 = vrot.slane %v220, %v224
    %v231 = vunpack.c.l.b16 %v104
    %v232 = vunpack.c.h.b16 %v104
    %v233 = vunpack.c.l.b16 %v105
    %v234 = vunpack.c.h.b16 %v105
    %v235 = vunpack.c.l.b16 %v106
    %v236 = vunpack.c.h.b16 %v106
    %v237 = vunpack.c.l.b16 %v107
    %v238 = vpack.c.b16 %v231, %v231
    %v239 = vpack.c.b16 %v232, %v232
    %v240 = vpack.c.b16 %v233, %v233
    %v241 = vpack.c.b16 %v234, %v234
    %v242 = vpack.c.b16 %v235, %v235
    %v243 = vpack.c.b16 %v236, %v236
    %v244 = vpack.c.b16 %v237, %v237
    %v364 = vunpack.c.l.b16 %v108
    %v365 = vunpack.c.l.b16 %v109
    %v366 = vunpack.c.l.b16 %v110
    %v367 = vunpack.c.l.b16 %v111
    %v368 = vunpack.c.l.b16 %v112
    %v369 = vunpack.c.l.b16 %v113
    %v370 = vunpack.c.l.b16 %v114
    %v371 = vunpack.c.l.b16 %v115
    %v372 = vunpack.c.l.b16 %v116
    %v373 = vunpack.c.l.b16 %v117
    %v374 = vunpack.c.l.b16 %v118
    %v375 = vunpack.c.l.b16 %v119
    %v376 = vunpack.c.l.b16 %v120
    %v377 = vunpack.c.l.b16 %v121
    %v378 = vunpack.c.l.b16 %v122
    %v379 = vunpack.c.l.b16 %v123
    %v380 = vunpack.c.l.b16 %v124
    %v381 = vunpack.c.l.b16 %v125
    %v382 = vunpack.c.l.b16 %v126
    %v383 = vunpack.c.l.b16 %v127
    %v384 = vunpack.c.l.b16 %v128
    %v385 = vunpack.c.l.b16 %v129
    %v386 = vunpack.c.l.b16 %v130
    %v387 = vunpack.c.l.b16 %v131
    %v388 = vunpack.c.l.b16 %v132
    %v389 = vunpack.c.l.b16 %v133
    %v390 = vunpack.c.l.b16 %v134
    %v391 = vunpack.c.l.b16 %v135
    %v392 = vunpack.c.l.b16 %v136
    %v393 = vunpack.c.l.b16 %v137
    %v394 = vunpack.c.l.b16 %v138
    %v395 = vunpack.c.l.b16 %v139
    %v396 = vunpack.c.l.b16 %v140
    %v397 = vunpack.c.l.b16 %v141
    %v398 = vunpack.c.l.b16 %v142
    %v399 = vunpack.c.l.b16 %v143
    %v400 = vunpack.c.l.b16 %v144
    %v401 = vunpack.c.l.b16 %v145
    %v402 = vunpack.c.l.b16 %v146
    %v403 = vunpack.c.l.b16 %v147
    %v404 = vunpack.c.l.b16 %v148
    %v405 = vunpack.c.l.b16 %v149
    %v406 = vunpack.c.l.b16 %v150
    %v407 = vunpack.c.l.b16 %v151
    %v408 = vunpack.c.l.b16 %v152
    %v409 = vunpack.c.l.b16 %v153
    %v410 = vunpack.c.l.b16 %v154
    %v411 = vunpack.c.l.b16 %v155
    %v412 = vunpack.c.l.b16 %v156
    %v413 = vunpack.c.l.b16 %v157
    %v414 = vunpack.c.l.b16 %v158
    %v415 = vunpack.c.l.b16 %v159
    %v416 = vunpack.c.l.b16 %v160
    %v417 = vunpack.c.l.b16 %v161
    %v418 = vunpack.c.l.b16 %v162
    %v419 = vunpack.c.l.b16 %v163
    %v420 = vunpack.c.l.b16 %v164
    %v421 = vunpack.c.l.b16 %v165
    %v422 = vunpack.c.l.b16 %v166
    %v423 = vunpack.c.l.b16 %v167
    %v424 = vunpack.c.l.b16 %v168
    %v425 = vunpack.c.l.b16 %v169
    %v426 = vunpack.c.l.b16 %v170
    %v427 = vunpack.c.l.b16 %v171
    %v428 = vunpack.c.l.b16 %v172
    %v429 = vunpack.c.l.b16 %v173
    %v430 = vunpack.c.l.b16 %v174
    %v431 = vunpack.c.l.b16 %v175
    %v432 = vunpack.c.l.b16 %v176
    %v433 = vunpack.c.l.b16 %v177
    %v434 = vunpack.c.l.b16 %v178
    %v435 = vunpack.c.l.b16 %v179
    %v436 = vunpack.c.l.b16 %v180
    %v437 = vunpack.c.l.b16 %v181
    %v438 = vunpack.c.l.b16 %v182
    %v439 = vunpack.c.l.b16 %v183
    %v440 = vunpack.c.l.b16 %v184
    %v441 = vunpack.c.l.b16 %v185
    %v442 = vunpack.c.l.b16 %v186
    %v443 = vunpack.c.l.b16 %v187
    %v444 = vunpack.c.l.b16 %v188
    %v445 = vunpack.c.l.b16 %v189
    %v446 = vunpack.c.l.b16 %v190
    %v447 = vunpack.c.l.b16 %v191
    %v448 = vunpack.c.l.b16 %v192
    %v449 = vunpack.c.l.b16 %v193
    %v450 = vunpack.c.l.b16 %v194
    %v451 = vunpack.c.l.b16 %v195
    %v452 = vunpack.c.l.b16 %v196
    %v453 = vunpack.c.l.b16 %v197
    %v454 = vunpack.c.l.b16 %v198
    %v455 = vunpack.c.l.b16 %v199
    %v456 = vunpack.c.l.b16 %v200
    %v457 = vunpack.c.l.b16 %v201
    %v458 = vunpack.c.l.b16 %v202
    %v459 = vunpack.c.l.b16 %v203
    %v460 = vunpack.c.l.b16 %v204
    %v461 = vunpack.c.l.b16 %v205
    %v462 = vunpack.c.l.b16 %v206
    %v463 = vunpack.c.l.b16 %v207
    %v464 = vunpack.c.l.b16 %v208
    %v465 = vunpack.c.l.b16 %v209
    %v466 = vunpack.c.l.b16 %v210
    %v467 = vunpack.c.l.b16 %v211
    %v468 = vunpack.c.l.b16 %v212
    %v469 = vunpack.c.l.b16 %v213
    %v470 = vunpack.c.l.b16 %v214
    %v471 = vunpack.c.l.b16 %v215
    %v472 = vunpack.c.l.b16 %v216
    %v473 = vunpack.c.l.b16 %v217
    %v474 = vunpack.c.l.b16 %v218
    %v475 = vunpack.c.l.b16 %v219
    %v476 = vpack.c.b16 %v365, %v364
    %v477 = vpack.c.b16 %v367, %v366
    %v478 = vpack.c.b16 %v369, %v368
    %v479 = vpack.c.b16 %v371, %v370
    %v480 = vpack.c.b16 %v373, %v372
    %v481 = vpack.c.b16 %v375, %v374
    %v482 = vpack.c.b16 %v377, %v376
    %v483 = vpack.c.b16 %v379, %v378
    %v484 = vpack.c.b16 %v381, %v380
    %v485 = vpack.c.b16 %v383, %v382
    %v486 = vpack.c.b16 %v385, %v384
    %v487 = vpack.c.b16 %v387, %v386
    %v488 = vpack.c.b16 %v389, %v388
    %v489 = vpack.c.b16 %v391, %v390
    %v490 = vpack.c.b16 %v393, %v392
    %v491 = vpack.c.b16 %v395, %v394
    %v492 = vpack.c.b16 %v397, %v396
    %v493 = vpack.c.b16 %v399, %v398
    %v494 = vpack.c.b16 %v401, %v400
    %v495 = vpack.c.b16 %v403, %v402
    %v496 = vpack.c.b16 %v405, %v404
    %v497 = vpack.c.b16 %v407, %v406
    %v498 = vpack.c.b16 %v409, %v408
    %v499 = vpack.c.b16 %v411, %v410
    %v500 = vpack.c.b16 %v413, %v412
    %v501 = vpack.c.b16 %v415, %v414
    %v502 = vpack.c.b16 %v417, %v416
    %v503 = vpack.c.b16 %v419, %v418
    %v504 = vpack.c.b16 %v421, %v420
    %v505 = vpack.c.b16 %v423, %v422
    %v506 = vpack.c.b16 %v425, %v424
    %v507 = vpack.c.b16 %v427, %v426
    %v508 = vpack.c.b16 %v429, %v428
    %v509 = vpack.c.b16 %v431, %v430
    %v510 = vpack.c.b16 %v433, %v432
    %v511 = vpack.c.b16 %v435, %v434
    %v512 = vpack.c.b16 %v437, %v436
    %v513 = vpack.c.b16 %v439, %v438
    %v514 = vpack.c.b16 %v441, %v440
    %v515 = vpack.c.b16 %v443, %v442
    %v516 = vpack.c.b16 %v445, %v444
    %v517 = vpack.c.b16 %v447, %v446
    %v518 = vpack.c.b16 %v449, %v448
    %v519 = vpack.c.b16 %v451, %v450
    %v520 = vpack.c.b16 %v453, %v452
    %v521 = vpack.c.b16 %v455, %v454
    %v522 = vpack.c.b16 %v457, %v456
    %v523 = vpack.c.b16 %v459, %v458
    %v524 = vpack.c.b16 %v461, %v460
    %v525 = vpack.c.b16 %v463, %v462
    %v526 = vpack.c.b16 %v465, %v464
    %v527 = vpack.c.b16 %v467, %v466
    %v528 = vpack.c.b16 %v469, %v468
    %v529 = vpack.c.b16 %v471, %v470
    %v530 = vpack.c.b16 %v473, %v472
    %v531 = vpack.c.b16 %v475, %v474
    %588 = vmatprep.subr.bf16.mxu0 0
    %589 = vmatpush1.bf16.msra.mxu0 %v476
    %590 = vmatprep.subr.bf16.mxu0 0
    %591 = vmatpush1.bf16.msra.mxu0 %v477
    %592 = vmatprep.subr.bf16.mxu0 0
    %593 = vmatpush1.bf16.msra.mxu0 %v478
    %594 = vmatprep.subr.bf16.mxu0 0
    %595 = vmatpush1.bf16.msra.mxu0 %v479
    %596 = vmatprep.subr.bf16.mxu0 0
    %597 = vmatpush1.bf16.msra.mxu0 %v480
    %598 = vmatprep.subr.bf16.mxu0 0
    %599 = vmatpush1.bf16.msra.mxu0 %v481
    %600 = vmatprep.subr.bf16.mxu0 0
    %601 = vmatpush1.bf16.msra.mxu0 %v482
    %602 = vmatprep.subr.bf16.mxu0 0
    %603 = vmatpush1.bf16.msra.mxu0 %v483
    %604 = vmatprep.subr.bf16.mxu0 0
    %605 = vmatpush1.bf16.msra.mxu0 %v484
    %606 = vmatprep.subr.bf16.mxu0 0
    %607 = vmatpush1.bf16.msra.mxu0 %v485
    %608 = vmatprep.subr.bf16.mxu0 0
    %609 = vmatpush1.bf16.msra.mxu0 %v486
    %610 = vmatprep.subr.bf16.mxu0 0
    %611 = vmatpush1.bf16.msra.mxu0 %v487
    %612 = vmatprep.subr.bf16.mxu0 0
    %613 = vmatpush1.bf16.msra.mxu0 %v488
    %614 = vmatprep.subr.bf16.mxu0 0
    %615 = vmatpush1.bf16.msra.mxu0 %v489
    %616 = vmatprep.subr.bf16.mxu0 0
    %617 = vmatpush1.bf16.msra.mxu0 %v490
    %618 = vmatprep.subr.bf16.mxu0 0
    %619 = vmatpush1.bf16.msra.mxu0 %v491
    %620 = vmatprep.mubr.bf16.mxu0 %v239
    %621 = vmatmul.mubr.bf16.gmra.mrb[0].mxu0 %v238
    %v622 = vpop.f32.mrb[0].mxu0
    %v623 = vadd.f32 %v225, %v622
    %v624 = vpop.f32.mrb[0].mxu0
    %v625 = vpop.f32.mrb[0].mxu0
    %v626 = vpop.f32.mrb[0].mxu0
    %627 = vdwg.mxu0
    %628 = vmatprep.subr.bf16.mxu0 0
    %629 = vmatpush1.bf16.msra.mxu0 %v492
    %630 = vmatprep.subr.bf16.mxu0 0
    %631 = vmatpush1.bf16.msra.mxu0 %v493
    %632 = vmatprep.subr.bf16.mxu0 0
    %633 = vmatpush1.bf16.msra.mxu0 %v494
    %634 = vmatprep.subr.bf16.mxu0 0
    %635 = vmatpush1.bf16.msra.mxu0 %v495
    %636 = vmatprep.subr.bf16.mxu0 0
    %637 = vmatpush1.bf16.msra.mxu0 %v496
    %638 = vmatprep.subr.bf16.mxu0 0
    %639 = vmatpush1.bf16.msra.mxu0 %v497
    %640 = vmatprep.subr.bf16.mxu0 0
    %641 = vmatpush1.bf16.msra.mxu0 %v498
    %642 = vmatprep.subr.bf16.mxu0 0
    %643 = vmatpush1.bf16.msra.mxu0 %v499
    %644 = vmatprep.subr.bf16.mxu0 0
    %645 = vmatpush1.bf16.msra.mxu0 %v500
    %646 = vmatprep.subr.bf16.mxu0 0
    %647 = vmatpush1.bf16.msra.mxu0 %v501
    %648 = vmatprep.subr.bf16.mxu0 0
    %649 = vmatpush1.bf16.msra.mxu0 %v502
    %650 = vmatprep.subr.bf16.mxu0 0
    %651 = vmatpush1.bf16.msra.mxu0 %v503
    %652 = vmatprep.subr.bf16.mxu0 0
    %653 = vmatpush1.bf16.msra.mxu0 %v504
    %654 = vmatprep.subr.bf16.mxu0 0
    %655 = vmatpush1.bf16.msra.mxu0 %v505
    %656 = vmatprep.subr.bf16.mxu0 0
    %657 = vmatpush1.bf16.msra.mxu0 %v506
    %658 = vmatprep.subr.bf16.mxu0 0
    %659 = vmatpush1.bf16.msra.mxu0 %v507
    %660 = vmatprep.mubr.bf16.mxu0 %v241
    %661 = vmatmul.mubr.bf16.gmra.mrb[0].mxu0 %v240
    %v662 = vpop.f32.mrb[0].mxu0
    %v663 = vadd.f32 %v623, %v662
    %v664 = vpop.f32.mrb[0].mxu0
    %v665 = vpop.f32.mrb[0].mxu0
    %v666 = vpop.f32.mrb[0].mxu0
    %667 = vdwg.mxu0
    %668 = vmatprep.subr.bf16.mxu0 0
    %669 = vmatpush1.bf16.msra.mxu0 %v508
    %670 = vmatprep.subr.bf16.mxu0 0
    %671 = vmatpush1.bf16.msra.mxu0 %v509
    %672 = vmatprep.subr.bf16.mxu0 0
    %673 = vmatpush1.bf16.msra.mxu0 %v510
    %674 = vmatprep.subr.bf16.mxu0 0
    %675 = vmatpush1.bf16.msra.mxu0 %v511
    %676 = vmatprep.subr.bf16.mxu0 0
    %677 = vmatpush1.bf16.msra.mxu0 %v512
    %678 = vmatprep.subr.bf16.mxu0 0
    %679 = vmatpush1.bf16.msra.mxu0 %v513
    %680 = vmatprep.subr.bf16.mxu0 0
    %681 = vmatpush1.bf16.msra.mxu0 %v514
    %682 = vmatprep.subr.bf16.mxu0 0
    %683 = vmatpush1.bf16.msra.mxu0 %v515
    %684 = vmatprep.subr.bf16.mxu0 0
    %685 = vmatpush1.bf16.msra.mxu0 %v516
    %686 = vmatprep.subr.bf16.mxu0 0
    %687 = vmatpush1.bf16.msra.mxu0 %v517
    %688 = vmatprep.subr.bf16.mxu0 0
    %689 = vmatpush1.bf16.msra.mxu0 %v518
    %690 = vmatprep.subr.bf16.mxu0 0
    %691 = vmatpush1.bf16.msra.mxu0 %v519
    %692 = vmatprep.subr.bf16.mxu0 0
    %693 = vmatpush1.bf16.msra.mxu0 %v520
    %694 = vmatprep.subr.bf16.mxu0 0
    %695 = vmatpush1.bf16.msra.mxu0 %v521
    %696 = vmatprep.subr.bf16.mxu0 0
    %697 = vmatpush1.bf16.msra.mxu0 %v522
    %698 = vmatprep.subr.bf16.mxu0 0
    %699 = vmatpush1.bf16.msra.mxu0 %v523
    %700 = vmatprep.mubr.bf16.mxu0 %v243
    %701 = vmatmul.mubr.bf16.gmra.mrb[0].mxu0 %v242
    %v702 = vpop.f32.mrb[0].mxu0
    %v703 = vadd.f32 %v663, %v702
    %v704 = vpop.f32.mrb[0].mxu0
    %v705 = vpop.f32.mrb[0].mxu0
    %v706 = vpop.f32.mrb[0].mxu0
    %707 = vdwg.mxu0
    %708 = vmatprep.subr.bf16.mxu0 0
    %709 = vmatpush1.bf16.msra.mxu0 %v524
    %710 = vmatprep.subr.bf16.mxu0 0
    %711 = vmatpush1.bf16.msra.mxu0 %v525
    %712 = vmatprep.subr.bf16.mxu0 0
    %713 = vmatpush1.bf16.msra.mxu0 %v526
    %714 = vmatprep.subr.bf16.mxu0 0
    %715 = vmatpush1.bf16.msra.mxu0 %v527
    %716 = vmatprep.subr.bf16.mxu0 0
    %717 = vmatpush1.bf16.msra.mxu0 %v528
    %718 = vmatprep.subr.bf16.mxu0 0
    %719 = vmatpush1.bf16.msra.mxu0 %v529
    %720 = vmatprep.subr.bf16.mxu0 0
    %721 = vmatpush1.bf16.msra.mxu0 %v530
    %722 = vmatprep.subr.bf16.mxu0 0
    %723 = vmatpush1.bf16.msra.mxu0 %v531
    %724 = vmatprep.subr.bf16.mxu0 0
    %725 = vmatpush1.bf16.msra.mxu0 0
    %726 = vmatprep.subr.bf16.mxu0 0
    %727 = vmatpush1.bf16.msra.mxu0 0
    %728 = vmatprep.subr.bf16.mxu0 0
    %729 = vmatpush1.bf16.msra.mxu0 0
    %730 = vmatprep.subr.bf16.mxu0 0
    %731 = vmatpush1.bf16.msra.mxu0 0
    %732 = vmatprep.subr.bf16.mxu0 0
    %733 = vmatpush1.bf16.msra.mxu0 0
    %734 = vmatprep.subr.bf16.mxu0 0
    %735 = vmatpush1.bf16.msra.mxu0 0
    %736 = vmatprep.subr.bf16.mxu0 0
    %737 = vmatpush1.bf16.msra.mxu0 0
    %738 = vmatprep.subr.bf16.mxu0 0
    %739 = vmatpush1.bf16.msra.mxu0 0
    %740 = vmatprep.mubr.bf16.mxu0 0
    %741 = vmatmul.mubr.bf16.gmra.mrb[0].mxu0 %v244
    %v742 = vpop.f32.mrb[0].mxu0
    %v743 = vadd.f32 %v703, %v742
    %v744 = vpop.f32.mrb[0].mxu0
    %v745 = vpop.f32.mrb[0].mxu0
    %v746 = vpop.f32.mrb[0].mxu0
    %747 = vdwg.mxu0
    %v748 = vmax.f32 %v743, 0.0
    %v749 = vpack.c.bf16 %v748, %v748
    %v750 = vld [vmem:[#allocation8] sm:$0xf]
    %v751 = vld [vmem:[#allocation8 + $0x4] sm:$0xf]
    %v752 = vld [vmem:[#allocation8 + $0x8] sm:$0xf]
    %v753 = vld [vmem:[#allocation8 + $0xc] sm:$0xf]
    %v754 = vld [vmem:[#allocation8 + $0x10] sm:$0xf]
    %v755 = vld [vmem:[#allocation8 + $0x14] sm:$0xf]
    %v756 = vld [vmem:[#allocation8 + $0x18] sm:$0xf]
    %v757 = vld [vmem:[#allocation8 + $0x1c] sm:$0xf]
    %v758 = vld [vmem:[#allocation8 + $0x20] sm:$0xf]
    %v759 = vld [vmem:[#allocation8 + $0x24] sm:$0xf]
    %v760 = vld [vmem:[#allocation8 + $0x28] sm:$0xf]
    %v761 = vld [vmem:[#allocation8 + $0x2c] sm:$0xf]
    %v762 = vld [vmem:[#allocation8 + $0x30] sm:$0xf]
    %v763 = vld [vmem:[#allocation8 + $0x34] sm:$0xf]
    %v764 = vld [vmem:[#allocation8 + $0x38] sm:$0xf]
    %v765 = vld [vmem:[#allocation8 + $0x3c] sm:$0xf]
    %v766 = vld [vmem:[%s4] sm:$0x1]
    %v768 = vlaneseq
    %v769 = vshrl.u32 %v768, 7
    %v770 = vsub.s32 0, %v769
    %v771 = vrot.slane %v766, %v770
    %v789 = vunpack.c.l.b16 %v750
    %v790 = vunpack.c.l.b16 %v751
    %v791 = vunpack.c.l.b16 %v752
    %v792 = vunpack.c.l.b16 %v753
    %v793 = vunpack.c.l.b16 %v754
    %v794 = vunpack.c.l.b16 %v755
    %v795 = vunpack.c.l.b16 %v756
    %v796 = vunpack.c.l.b16 %v757
    %v797 = vunpack.c.l.b16 %v758
    %v798 = vunpack.c.l.b16 %v759
    %v799 = vunpack.c.l.b16 %v760
    %v800 = vunpack.c.l.b16 %v761
    %v801 = vunpack.c.l.b16 %v762
    %v802 = vunpack.c.l.b16 %v763
    %v803 = vunpack.c.l.b16 %v764
    %v804 = vunpack.c.l.b16 %v765
    %v805 = vpack.c.b16 %v790, %v789
    %v806 = vpack.c.b16 %v792, %v791
    %v807 = vpack.c.b16 %v794, %v793
    %v808 = vpack.c.b16 %v796, %v795
    %v809 = vpack.c.b16 %v798, %v797
    %v810 = vpack.c.b16 %v800, %v799
    %v811 = vpack.c.b16 %v802, %v801
    %v812 = vpack.c.b16 %v804, %v803
    %821 = vmatprep.subr.bf16.mxu0 0
    %822 = vmatpush1.bf16.msra.mxu0 %v805
    %823 = vmatprep.subr.bf16.mxu0 0
    %824 = vmatpush1.bf16.msra.mxu0 %v806
    %825 = vmatprep.subr.bf16.mxu0 0
    %826 = vmatpush1.bf16.msra.mxu0 %v807
    %827 = vmatprep.subr.bf16.mxu0 0
    %828 = vmatpush1.bf16.msra.mxu0 %v808
    %829 = vmatprep.subr.bf16.mxu0 0
    %830 = vmatpush1.bf16.msra.mxu0 %v809
    %831 = vmatprep.subr.bf16.mxu0 0
    %832 = vmatpush1.bf16.msra.mxu0 %v810
    %833 = vmatprep.subr.bf16.mxu0 0
    %834 = vmatpush1.bf16.msra.mxu0 %v811
    %835 = vmatprep.subr.bf16.mxu0 0
    %836 = vmatpush1.bf16.msra.mxu0 %v812
    %837 = vmatprep.subr.bf16.mxu0 0
    %838 = vmatpush1.bf16.msra.mxu0 0
    %839 = vmatprep.subr.bf16.mxu0 0
    %840 = vmatpush1.bf16.msra.mxu0 0
    %841 = vmatprep.subr.bf16.mxu0 0
    %842 = vmatpush1.bf16.msra.mxu0 0
    %843 = vmatprep.subr.bf16.mxu0 0
    %844 = vmatpush1.bf16.msra.mxu0 0
    %845 = vmatprep.subr.bf16.mxu0 0
    %846 = vmatpush1.bf16.msra.mxu0 0
    %847 = vmatprep.subr.bf16.mxu0 0
    %848 = vmatpush1.bf16.msra.mxu0 0
    %849 = vmatprep.subr.bf16.mxu0 0
    %850 = vmatpush1.bf16.msra.mxu0 0
    %851 = vmatprep.subr.bf16.mxu0 0
    %852 = vmatpush1.bf16.msra.mxu0 0
    %853 = vmatprep.mubr.bf16.mxu0 0
    %854 = vmatmul.mubr.bf16.gmra.mrb[0].mxu0 %v749
    %v855 = vpop.f32.mrb[0].mxu0
    %v856 = vadd.f32 %v771, %v855
    %v857 = vpop.f32.mrb[0].mxu0
    %v858 = vpop.f32.mrb[0].mxu0
    %v859 = vpop.f32.mrb[0].mxu0
    %860 = vdwg.mxu0
    %v861 = vpack.c.bf16 %v856, %v856
    %862 = vst [vmem:[#allocation9] sm:$0xf] %v861
    // Predicated region
    $region34: #{tpu_custom_call.1} parent=1 // pred_check
      _
    $region35: #{tpu_custom_call.1} parent=1 // pred_check_branch
      %864 = sbr.rel (0) target = $region37
    $region36: #{tpu_custom_call.1} parent=1 // pred_region
      %s866 = ssub.s32 64, 64
      %867 = vsyncadd [#allocation5], %s866
      %s869 = sshll.u32 [#allocation9], 4
      %s870 = int_to_ptr.vmem [resolvable:$true] %s869
      %872 = dma.vmem_to_hbm [thread:$0]  %s870, 64, %s5, [#allocation5]
    $region37: #{tpu_custom_call.1} parent=1 // pred_fallthru
      _
    // Predicated region
    $region38: #{tpu_custom_call.1} parent=1 // pred_check
      _
    $region39: #{tpu_custom_call.1} parent=1 // pred_check_branch
      %874 = sbr.rel (0) target = $region41
    $region40: #{tpu_custom_call.1} parent=1 // pred_region
      %875 = dma.done [#allocation5], 64
    $region41: #{tpu_custom_call.1} parent=1 // pred_fallthru
      _
    %876 = vsyncpa [#allocation4], 1
    %877 = vsyncpa [#allocation7], 1
    %878 = vsyncpa [#allocation5], 1

</llo_original>
